<compile_context>
chip_gen: v7x
topology: tpu7x:2x2x1
jax: 0.10.0
libtpu: 0.0.40
codegen_flags: <defaults>
</compile_context>

<pallas_src>
import jax
import jax.numpy as jnp
from jax.experimental import pallas as pl
from jax.experimental.pallas import tpu as pltpu


def _smooth_kernel(x_ref, o_ref):
    # x_ref: (P, H, W) unpadded planes in VMEM; o_ref: (P, H, W) output.
    x = x_ref[...].astype(jnp.float32)

    # Replication pad along W (last axis) + horizontal [1, 2, 1] pass.
    xw = jnp.concatenate([x[:, :, :1], x, x[:, :, -1:]], axis=2)    # (P, H, W+2)
    r = xw[:, :, :-2] + 2.0 * xw[:, :, 1:-1] + xw[:, :, 2:]         # (P, H, W)

    # Replication pad along H + vertical [1, 2, 1] pass, normalize by 16.
    rh = jnp.concatenate([r[:, :1, :], r, r[:, -1:, :]], axis=1)    # (P, H+2, W)
    acc = (rh[:, :-2, :] + 2.0 * rh[:, 1:-1, :] + rh[:, 2:, :]) * (1.0 / 16.0)

    o_ref[...] = acc.astype(o_ref.dtype)


def _vmem_limit_bytes() -> int:
    """~3/4 of physical VMEM (so v5e/v6e sizing doesn't OOM v7x), capped."""
    cap = 64 << 20  # conservative default (v7x physical VMEM per TC)
    try:
        info = pltpu.get_tpu_info()
        for attr in ("vmem_capacity_bytes", "vmem_bytes", "vmem_size_bytes"):
            v = getattr(info, attr, None)
            if v:
                cap = int(v)
                break
    except Exception:
        pass
    return int(min(cap * 3 // 4, 100 << 20))


def _planes_per_block(n: int, h: int, w: int, itemsize: int,
                      vmem_limit: int) -> int:
    # Per plane: double-buffered input + output tiles plus ~4 f32 temporaries
    # (x, padded, row-pass result, acc) used by the in-kernel compute.
    per_plane = 2 * h * w * itemsize + 2 * h * w * itemsize + 4 * h * w * 4
    budget = max(vmem_limit // 2, per_plane)       # leave half as headroom
    p = max(1, min(n, budget // per_plane))
    if n >= 2:
        # Keep >= 2 grid steps so the 'parallel' axis can use both v7x cores.
        p = min(p, pl.cdiv(n, 2))
    return int(p)


def smooth(x: jax.Array) -> jax.Array:
    """Equivalent of Smooth.forward for NCHW input x (any float dtype)."""
    b, c, h, w = x.shape
    n = b * c
    xr = x.reshape(n, h, w)

    vmem_limit = _vmem_limit_bytes()
    itemsize = jnp.dtype(x.dtype).itemsize
    p = _planes_per_block(n, h, w, itemsize, vmem_limit)
    # Partial last block (if n % p != 0): OOB input lanes are unused garbage,
    # OOB output writes are masked; planes are independent, so this is safe.
    grid = (pl.cdiv(n, p),)

    out = pl.pallas_call(
        _smooth_kernel,
        out_shape=jax.ShapeDtypeStruct((n, h, w), x.dtype),
        grid=grid,
        in_specs=[pl.BlockSpec((p, h, w), lambda i: (i, 0, 0))],
        out_specs=pl.BlockSpec((p, h, w), lambda i: (i, 0, 0)),
        compiler_params=pltpu.CompilerParams(
            dimension_semantics=("parallel",),
            vmem_limit_bytes=vmem_limit,
        ),
        cost_estimate=pl.CostEstimate(
            flops=9 * n * h * w,
            transcendentals=0,
            bytes_accessed=2 * n * h * w * itemsize,
        ),
    )(xr)
    return out.reshape(b, c, h, w)


# ---------------------------------------------------------------------------
# Validation
# ---------------------------------------------------------------------------

_W3 = [[1.0, 2.0, 1.0], [2.0, 4.0, 2.0], [1.0, 2.0, 1.0]]


def _smooth_reference(x: jax.Array) -> jax.Array:
    """Plain-JAX reference (same math as the PyTorch module), f32 output."""
    b, c, h, w = x.shape
    xr = x.reshape(b * c, h, w).astype(jnp.float32)
    xp = jnp.pad(xr, ((0, 0), (1, 1), (1, 1)), mode="edge")
    acc = jnp.zeros((b * c, h, w), dtype=jnp.float32)
    for dy in range(3):
        for dx in range(3):
            acc = acc + (_W3[dy][dx] / 16.0) * xp[:, dy:dy + h, dx:dx + w]
    return acc.reshape(b, c, h, w)


if __name__ == "__main__":
    key = jax.random.PRNGKey(0)

    # Primary test (matches module usage): NCHW float32.
    b, c, h, w = 2, 4, 16, 16
    x = jax.random.normal(key, (b, c, h, w), dtype=jnp.float32)
    y = jax.block_until_ready(smooth(x))
    y_ref = _smooth_reference(x)
    assert y.shape == (b, c, h, w)
    assert jnp.allclose(y.astype(jnp.float32), y_ref, atol=1e-5, rtol=1e-5)

    # Plane count not divisible by the chosen block size -> exercises the
    # masked boundary block.
    x2 = jax.random.normal(jax.random.PRNGKey(1), (1, 3, 16, 16), jnp.float32)
    y2 = jax.block_until_ready(smooth(x2))
    assert jnp.allclose(y2.astype(jnp.float32), _smooth_reference(x2),
                        atol=1e-5, rtol=1e-5)

    # bf16 storage stays bf16 in HBM; accumulation is f32 in-kernel.
    xb = x.astype(jnp.bfloat16)
    yb = jax.block_until_ready(smooth(xb))
    assert yb.dtype == jnp.bfloat16
    yb_ref = _smooth_reference(xb.astype(jnp.float32))
    assert jnp.allclose(yb.astype(jnp.float32), yb_ref, atol=2e-2, rtol=2e-2)

    print("KERNEL_OK")
</pallas_src>

<mosaic_0001>
module attributes {stable_mosaic.version = 11 : i64} {
  func.func @_smooth_kernel(%arg0: i32, %arg1: memref<4x16x16xf32, #tpu.memory_space<vmem>>, %arg2: memref<4x16x16xf32, #tpu.memory_space<vmem>>) attributes {dimension_semantics = [#tpu.dimension_semantics<parallel>], iteration_bounds = array<i64: 2>, scalar_prefetch = 0 : i64, scratch_operands = 0 : i64, tpu.core_type = #tpu.core_type<tc>, window_params = [{transform_indices = @transform_0, window_bounds = array<i64: 4, 16, 16>}, {transform_indices = @transform_1, window_bounds = array<i64: 4, 16, 16>}]} {
    %c0 = arith.constant 0 : index
    %c0_0 = arith.constant 0 : index
    %c0_1 = arith.constant 0 : index
    %0 = vector.load %arg1[%c0, %c0_0, %c0_1] : memref<4x16x16xf32, #tpu.memory_space<vmem>>, vector<4x16x16xf32>
    %1 = vector.extract_strided_slice %0 {offsets = [0, 0, 0], sizes = [4, 16, 1], strides = [1, 1, 1]} : vector<4x16x16xf32> to vector<4x16x1xf32>
    %2 = vector.extract_strided_slice %0 {offsets = [0, 0, 15], sizes = [4, 16, 1], strides = [1, 1, 1]} : vector<4x16x16xf32> to vector<4x16x1xf32>
    %3 = tpu.concatenate %1, %0, %2 in 2 : vector<4x16x1xf32>, vector<4x16x16xf32>, vector<4x16x1xf32> -> vector<4x16x18xf32>
    %4 = vector.extract_strided_slice %3 {offsets = [0, 0, 0], sizes = [4, 16, 16], strides = [1, 1, 1]} : vector<4x16x18xf32> to vector<4x16x16xf32>
    %5 = vector.extract_strided_slice %3 {offsets = [0, 0, 1], sizes = [4, 16, 16], strides = [1, 1, 1]} : vector<4x16x18xf32> to vector<4x16x16xf32>
    %cst = arith.constant 2.000000e+00 : f32
    %6 = vector.broadcast %cst : f32 to vector<4x16x16xf32>
    %7 = arith.mulf %6, %5 : vector<4x16x16xf32>
    %8 = arith.addf %4, %7 : vector<4x16x16xf32>
    %9 = vector.extract_strided_slice %3 {offsets = [0, 0, 2], sizes = [4, 16, 16], strides = [1, 1, 1]} : vector<4x16x18xf32> to vector<4x16x16xf32>
    %10 = arith.addf %8, %9 : vector<4x16x16xf32>
    %11 = vector.extract_strided_slice %10 {offsets = [0, 0, 0], sizes = [4, 1, 16], strides = [1, 1, 1]} : vector<4x16x16xf32> to vector<4x1x16xf32>
    %12 = vector.extract_strided_slice %10 {offsets = [0, 15, 0], sizes = [4, 1, 16], strides = [1, 1, 1]} : vector<4x16x16xf32> to vector<4x1x16xf32>
    %13 = tpu.concatenate %11, %10, %12 in 1 : vector<4x1x16xf32>, vector<4x16x16xf32>, vector<4x1x16xf32> -> vector<4x18x16xf32>
    %14 = vector.extract_strided_slice %13 {offsets = [0, 0, 0], sizes = [4, 16, 16], strides = [1, 1, 1]} : vector<4x18x16xf32> to vector<4x16x16xf32>
    %15 = vector.extract_strided_slice %13 {offsets = [0, 1, 0], sizes = [4, 16, 16], strides = [1, 1, 1]} : vector<4x18x16xf32> to vector<4x16x16xf32>
    %cst_2 = arith.constant 2.000000e+00 : f32
    %16 = vector.broadcast %cst_2 : f32 to vector<4x16x16xf32>
    %17 = arith.mulf %16, %15 : vector<4x16x16xf32>
    %18 = arith.addf %14, %17 : vector<4x16x16xf32>
    %19 = vector.extract_strided_slice %13 {offsets = [0, 2, 0], sizes = [4, 16, 16], strides = [1, 1, 1]} : vector<4x18x16xf32> to vector<4x16x16xf32>
    %20 = arith.addf %18, %19 : vector<4x16x16xf32>
    %cst_3 = arith.constant 6.250000e-02 : f32
    %21 = vector.broadcast %cst_3 : f32 to vector<4x16x16xf32>
    %22 = arith.mulf %20, %21 : vector<4x16x16xf32>
    %c0_4 = arith.constant 0 : index
    %c0_5 = arith.constant 0 : index
    %c0_6 = arith.constant 0 : index
    %23 = vector.load %arg2[%c0_4, %c0_5, %c0_6] : memref<4x16x16xf32, #tpu.memory_space<vmem>>, vector<4x16x16xf32>
    tpu.vector_store %arg2[%c0_4, %c0_5, %c0_6], %22 {strides = array<i32>} : memref<4x16x16xf32, #tpu.memory_space<vmem>>, vector<4x16x16xf32>,
    return
  }
  func.func @transform_0(%arg0: i32) -> (i32, i32, i32) {
    %c0_i32 = arith.constant 0 : i32
    %c0_i32_0 = arith.constant 0 : i32
    %c0_i32_1 = arith.constant 0 : i32
    return %arg0, %c0_i32, %c0_i32_0 : i32, i32, i32
  }
  func.func @transform_1(%arg0: i32) -> (i32, i32, i32) {
    %c0_i32 = arith.constant 0 : i32
    %c0_i32_0 = arith.constant 0 : i32
    %c0_i32_1 = arith.constant 0 : i32
    return %arg0, %c0_i32, %c0_i32_0 : i32, i32, i32
  }
}

</mosaic_0001>

<llo_original>
// kernel: tpu_custom_call.1
$region0: #{tpu_custom_call.1}
  #allocation0 [shape = 'u32[]', space=smem, size = 0x4, offset = 0x4, fixed_abs, tag = 'smem constant byte address 0x4 - core index']
  #allocation1 [shape = 'u32[144,128]{1,0:T(1,128)}', space=vmem, size = 0x12000, scoped, tag = 'internal scratch']
  %s0 = inlined_call_operand.hbm [shape: f32[8,16,16], index: 0, kind: input, shape index: {}]
  %s1 = inlined_call_operand.hbm [shape: f32[8,16,16], index: 1, kind: output, shape index: {}]
  %s2 = sld [smem:[#allocation0]]
  $region41: #{tpu_custom_call.1} parent=0
    _
  %s4 = ssub.s32 1, %s2
  %s5 = scalar_select 0, %s4, %s2
  $region1: #{tpu_custom_call.1} parent=0
    #allocation2 [shape = 'u8[65536]{0}', space=vmem, size = 0x10000, scoped, tag = 'input window, operand 0']
    #allocation3 [shape = 's32[2]{0}', space=sflag, size = 0x8, scoped, tag = 'scoped memory for tpu_custom_call.1']
    #allocation4 [shape = 's32[2]{0}', space=sflag, size = 0x8, scoped, tag = 'scoped memory for tpu_custom_call.1']
    #allocation5 [shape = 'u8[65536]{0}', space=vmem, size = 0x10000, scoped, tag = 'output window, operand 0']
    %6 = vsyncpa [#allocation3], 0
    %s7 = scalar_lea.sflag [#allocation3], 1
    %8 = vsyncpa %s7, 0
    %9 = vsyncpa [#allocation4], 0
    %s10 = scalar_lea.sflag [#allocation4], 1
    %11 = vsyncpa %s10, 0
    loop: start=0, step=1, limit=4
    $region2: #{tpu_custom_call.1} parent=1 // loop_pre_header
      _
    $region3: #{tpu_custom_call.1} parent=1 // loop_header
      %s13 = sphi 0, %s17
      %p14 = scmp.ge.s32.totalorder %s13, 4
      %s23 = sphi 0, %s25
      %s26 = sphi 0, %s23
      %s27 = sphi 0, %s26
      %s43 = sphi 0, %s27
      %s49 = sphi 0, %s51
      %s52 = sphi 0, %s49
      %s53 = sphi 0, %s52
      %s69 = sphi 0, %s53
    $region4: #{tpu_custom_call.1} parent=1 // loop_header_branch
      %16 = sbr.rel (%p14) target = $region8
    $region5: #{tpu_custom_call.1} parent=1 // loop_body
      %s18 = ssub.s32 %s13, 1
      %s19 = ssub.s32 %s13, 2
      %s20 = sadd.s32 %s13, 1
      %s21 = ssub.s32 %s13, %s20
      %p22 = scmp.eq.s32.totalorder %s21, 0
      %s24 = sadd.s32 %s23, 1
      %s25 = scalar_select %p22, %s23, %s24
      %p28 = pneg %p22
      %p29 = scmp.eq.s32.totalorder %s13, 1
      %p30 = por %p28, %p29
      %p31 = scmp.ne.s32.totalorder %s23, %s26
      %p32 = scmp.eq.s32.totalorder %s13, 0
      %p33 = por %p31, %p32
      %p34 = scmp.ne.s32.totalorder %s23, %s26
      %p35 = scmp.eq.s32.totalorder %s18, 1
      %p36 = por %p34, %p35
      %p37 = scmp.ne.s32.totalorder %s26, %s27
      %p38 = scmp.eq.s32.totalorder %s18, 0
      %p39 = por %p37, %p38
      %p40 = scmp.ne.s32.totalorder %s26, %s27
      %p41 = scmp.eq.s32.totalorder %s19, 1
      %p42 = por %p40, %p41
      %p44 = scmp.ne.s32.totalorder %s27, %s43
      %p45 = scmp.eq.s32.totalorder %s19, 0
      %p46 = por %p44, %p45
      %s47 = ssub.s32 %s13, %s20
      %p48 = scmp.eq.s32.totalorder %s47, 0
      %s50 = sadd.s32 %s49, 1
      %s51 = scalar_select %p48, %s49, %s50
      %p54 = pneg %p48
      %p55 = scmp.eq.s32.totalorder %s13, 1
      %p56 = por %p54, %p55
      %p57 = scmp.ne.s32.totalorder %s49, %s52
      %p58 = scmp.eq.s32.totalorder %s13, 0
      %p59 = por %p57, %p58
      %p60 = scmp.ne.s32.totalorder %s49, %s52
      %p61 = scmp.eq.s32.totalorder %s18, 1
      %p62 = por %p60, %p61
      %p63 = scmp.ne.s32.totalorder %s52, %s53
      %p64 = scmp.eq.s32.totalorder %s18, 0
      %p65 = por %p63, %p64
      %p66 = scmp.ne.s32.totalorder %s52, %s53
      %p67 = scmp.eq.s32.totalorder %s19, 1
      %p68 = por %p66, %p67
      %p70 = scmp.ne.s32.totalorder %s53, %s69
      %p71 = scmp.eq.s32.totalorder %s19, 0
      %p72 = por %p70, %p71
      %p73 = scmp.le.s32.totalorder 1, %s13
      %p74 = scmp.lt.s32.totalorder %s13, 3
      %p75 = pnand %p73, %p74
      %p76 = pneg %p75
      // Predicated region
      $region9: #{tpu_custom_call.1} parent=5 // pred_check
        _
      $region10: #{tpu_custom_call.1} parent=5 // pred_check_branch
        %78 = sbr.rel (%p75) target = $region12
      $region11: #{tpu_custom_call.1} parent=5 // pred_region
        %s79 = ssub.s32 %s13, 1
      $region12: #{tpu_custom_call.1} parent=5 // pred_fallthru
        _
      %p80 = scmp.lt.s32.totalorder %s13, 2
      // Predicated region
      $region13: #{tpu_custom_call.1} parent=5 // pred_check
        %p81 = pneg %p80
      $region14: #{tpu_custom_call.1} parent=5 // pred_check_branch
        %83 = sbr.rel (%p81) target = $region16
      $region15: #{tpu_custom_call.1} parent=5 // pred_region
        // Predicated region
        $region17: #{tpu_custom_call.1} parent=15 // pred_check
          %p84 = pneg %p33
        $region18: #{tpu_custom_call.1} parent=15 // pred_check_branch
          %86 = sbr.rel (%p84) target = $region20
        $region19: #{tpu_custom_call.1} parent=15 // pred_region
          %s87 = sand.u32 %s23, 1
          %s88 = scalar_lea.sflag [#allocation3], %s87
          %s89 = sand.u32 %s23, 1
          %s90 = smul.addr %s89, 64
          %s91 = scalar_lea.vmem [#allocation2], %s90
          %s92 = smul.u32 4, %s13
          %s94 = ssub.s32 1024, 1024
          %95 = vsyncadd %s88, %s94
          %s96 = smul.addr %s92, 2
          %s97 = smul.addr %s96, 128
          %s98 = scalar_lea.hbm %s0, %s97
          %s99 = sshll.u32 %s91, 4
          %s100 = int_to_ptr.vmem [resolvable:$true] %s99
          %105 = dma.hbm_to_vmem [thread:$0]  %s98, 1024, %s100, %s88, 128, 128, 8
        $region20: #{tpu_custom_call.1} parent=15 // pred_fallthru
          _
      $region16: #{tpu_custom_call.1} parent=5 // pred_fallthru
        _
      %p106 = scmp.le.s32.totalorder 1, %s13
      %p107 = scmp.lt.s32.totalorder %s13, 3
      %p108 = pnand %p106, %p107
      %p109 = pneg %p108
      // Predicated region
      $region21: #{tpu_custom_call.1} parent=5 // pred_check
        _
      $region22: #{tpu_custom_call.1} parent=5 // pred_check_branch
        %111 = sbr.rel (%p108) target = $region24
      $region23: #{tpu_custom_call.1} parent=5 // pred_region
        %s112 = ssub.s32 %s13, 1
        %s113 = sand.u32 %s26, 1
        %s114 = scalar_lea.sflag [#allocation3], %s113
        %s115 = sand.u32 %s26, 1
        %s116 = smul.addr %s115, 64
        %s117 = scalar_lea.vmem [#allocation2], %s116
        // Predicated region
        $region25: #{tpu_custom_call.1} parent=23 // pred_check
          %p118 = pneg %p39
        $region26: #{tpu_custom_call.1} parent=23 // pred_check_branch
          %120 = sbr.rel (%p118) target = $region28
        $region27: #{tpu_custom_call.1} parent=23 // pred_region
          %121 = dma.done %s114, 1024
        $region28: #{tpu_custom_call.1} parent=23 // pred_fallthru
          _
        %s122 = sand.u32 %s26, 1
        %s123 = scalar_lea.sflag [#allocation3], %s122
        %s124 = sand.u32 %s26, 1
        %s125 = smul.addr %s124, 64
        %s126 = scalar_lea.vmem [#allocation2], %s125
        %p127 = pneg %p39
        %p128 = pneg %p36
        %p129 = pneg %p65
        %p130 = pneg %p62
        %s131 = sand.u32 %s52, 1
        %s132 = scalar_lea.sflag [#allocation4], %s131
        %s133 = sand.u32 %s52, 1
        %s134 = smul.addr %s133, 64
        %s135 = scalar_lea.vmem [#allocation5], %s134
        %s136 = smul.u32 4, %s18
        %s137 = smul.u32 4, %s18
        %v138 = vld [vmem:[%s117] sm:$0xff]
        %v139 = vld [vmem:[%s117 + $0x8] sm:$0xff]
        %v140 = vld [vmem:[%s117 + $0x10] sm:$0xff]
        %v141 = vld [vmem:[%s117 + $0x18] sm:$0xff]
        %v142 = vld [vmem:[%s117 + $0x20] sm:$0xff]
        %v143 = vld [vmem:[%s117 + $0x28] sm:$0xff]
        %v144 = vld [vmem:[%s117 + $0x30] sm:$0xff]
        %v145 = vld [vmem:[%s117 + $0x38] sm:$0xff]
        %154 = vrot.lane.b32.xlu0 %v138, 1
        %v155 = vpop.permute.xlu0 %154
        %156 = vrot.lane.b32.xlu0 %v139, 1
        %v157 = vpop.permute.xlu0 %156
        %158 = vrot.lane.b32.xlu0 %v140, 1
        %v159 = vpop.permute.xlu0 %158
        %160 = vrot.lane.b32.xlu0 %v141, 1
        %v161 = vpop.permute.xlu0 %160
        %162 = vrot.lane.b32.xlu0 %v142, 1
        %v163 = vpop.permute.xlu0 %162
        %164 = vrot.lane.b32.xlu0 %v143, 1
        %v165 = vpop.permute.xlu0 %164
        %166 = vrot.lane.b32.xlu0 %v144, 1
        %v167 = vpop.permute.xlu0 %166
        %168 = vrot.lane.b32.xlu0 %v145, 1
        %v169 = vpop.permute.xlu0 %168
        %178 = vrot.lane.b32.xlu0 %v138, 2
        %v179 = vpop.permute.xlu0 %178
        %180 = vrot.lane.b32.xlu0 %v139, 2
        %v181 = vpop.permute.xlu0 %180
        %182 = vrot.lane.b32.xlu0 %v140, 2
        %v183 = vpop.permute.xlu0 %182
        %184 = vrot.lane.b32.xlu0 %v141, 2
        %v185 = vpop.permute.xlu0 %184
        %186 = vrot.lane.b32.xlu0 %v142, 2
        %v187 = vpop.permute.xlu0 %186
        %188 = vrot.lane.b32.xlu0 %v143, 2
        %v189 = vpop.permute.xlu0 %188
        %190 = vrot.lane.b32.xlu0 %v144, 2
        %v191 = vpop.permute.xlu0 %190
        %192 = vrot.lane.b32.xlu0 %v145, 2
        %v193 = vpop.permute.xlu0 %192
        %vm202 = vcmask 7168
        %v203 = vsel %vm202, %v138, %v155
        %v204 = vsel %vm202, %v139, %v157
        %v205 = vsel %vm202, %v140, %v159
        %v206 = vsel %vm202, %v141, %v161
        %v207 = vsel %vm202, %v142, %v163
        %v208 = vsel %vm202, %v143, %v165
        %v209 = vsel %vm202, %v144, %v167
        %v210 = vsel %vm202, %v145, %v169
        %vm211 = vcmask 138240
        %v212 = vsel %vm211, %v203, %v179
        %v213 = vsel %vm211, %v204, %v181
        %v214 = vsel %vm211, %v205, %v183
        %v215 = vsel %vm211, %v206, %v185
        %v216 = vsel %vm211, %v207, %v187
        %v217 = vsel %vm211, %v208, %v189
        %v218 = vsel %vm211, %v209, %v191
        %v219 = vsel %vm211, %v210, %v193
        %v220 = vmul.f32 %v212, 2.0
        %v221 = vmul.f32 %v213, 2.0
        %v222 = vmul.f32 %v214, 2.0
        %v223 = vmul.f32 %v215, 2.0
        %v224 = vmul.f32 %v216, 2.0
        %v225 = vmul.f32 %v217, 2.0
        %v226 = vmul.f32 %v218, 2.0
        %v227 = vmul.f32 %v219, 2.0
        %236 = vrot.lane.b32.xlu0 %v220, 127
        %v237 = vpop.permute.xlu0 %236
        %238 = vrot.lane.b32.xlu0 %v221, 127
        %v239 = vpop.permute.xlu0 %238
        %240 = vrot.lane.b32.xlu0 %v222, 127
        %v241 = vpop.permute.xlu0 %240
        %242 = vrot.lane.b32.xlu0 %v223, 127
        %v243 = vpop.permute.xlu0 %242
        %244 = vrot.lane.b32.xlu0 %v224, 127
        %v245 = vpop.permute.xlu0 %244
        %246 = vrot.lane.b32.xlu0 %v225, 127
        %v247 = vpop.permute.xlu0 %246
        %248 = vrot.lane.b32.xlu0 %v226, 127
        %v249 = vpop.permute.xlu0 %248
        %250 = vrot.lane.b32.xlu0 %v227, 127
        %v251 = vpop.permute.xlu0 %250
        %v260 = vadd.f32 %v212, %v237
        %v261 = vadd.f32 %v213, %v239
        %v262 = vadd.f32 %v214, %v241
        %v263 = vadd.f32 %v215, %v243
        %v264 = vadd.f32 %v216, %v245
        %v265 = vadd.f32 %v217, %v247
        %v266 = vadd.f32 %v218, %v249
        %v267 = vadd.f32 %v219, %v251
        %276 = vrot.lane.b32.xlu0 %v212, 126
        %v277 = vpop.permute.xlu0 %276
        %278 = vrot.lane.b32.xlu0 %v213, 126
        %v279 = vpop.permute.xlu0 %278
        %280 = vrot.lane.b32.xlu0 %v214, 126
        %v281 = vpop.permute.xlu0 %280
        %282 = vrot.lane.b32.xlu0 %v215, 126
        %v283 = vpop.permute.xlu0 %282
        %284 = vrot.lane.b32.xlu0 %v216, 126
        %v285 = vpop.permute.xlu0 %284
        %286 = vrot.lane.b32.xlu0 %v217, 126
        %v287 = vpop.permute.xlu0 %286
        %288 = vrot.lane.b32.xlu0 %v218, 126
        %v289 = vpop.permute.xlu0 %288
        %290 = vrot.lane.b32.xlu0 %v219, 126
        %v291 = vpop.permute.xlu0 %290
        %v300 = vadd.f32 %v260, %v277
        %v301 = vadd.f32 %v261, %v279
        %v302 = vadd.f32 %v262, %v281
        %v303 = vadd.f32 %v263, %v283
        %v304 = vadd.f32 %v264, %v285
        %v305 = vadd.f32 %v265, %v287
        %v306 = vadd.f32 %v266, %v289
        %v307 = vadd.f32 %v267, %v291
        %vm316 = vcmask 1040384
        %v317 = vrot.slane %v300, 7
        %v318 = vrot.slane %v301, 7
        %v319 = vsel %vm316, %v317, %v318
        %v320 = vrot.slane %v302, 7
        %v321 = vrot.slane %v303, 7
        %v322 = vsel %vm316, %v320, %v321
        %v323 = vrot.slane %v304, 7
        %v324 = vrot.slane %v305, 7
        %v325 = vsel %vm316, %v323, %v324
        %v326 = vrot.slane %v306, 7
        %v327 = vrot.slane %v307, 7
        %v328 = vsel %vm316, %v326, %v327
        %v341 = vrot.slane %v301, 6
        %v342 = vrot.slane %v303, 6
        %v343 = vrot.slane %v305, 6
        %v344 = vrot.slane %v307, 6
        %v349 = vsel %vm316, %v300, %v317
        %v350 = vsel %vm316, %v302, %v320
        %v351 = vsel %vm316, %v304, %v323
        %v352 = vsel %vm316, %v306, %v326
        %v353 = vsel %vm316, %v318, %v341
        %v354 = vsel %vm316, %v321, %v342
        %v355 = vsel %vm316, %v324, %v343
        %v356 = vsel %vm316, %v327, %v344
        %v357 = vmul.f32 %v349, 2.0
        %v358 = vmul.f32 %v319, 2.0
        %v359 = vmul.f32 %v353, 2.0
        %v360 = vmul.f32 %v350, 2.0
        %v361 = vmul.f32 %v322, 2.0
        %v362 = vmul.f32 %v354, 2.0
        %v363 = vmul.f32 %v351, 2.0
        %v364 = vmul.f32 %v325, 2.0
        %v365 = vmul.f32 %v355, 2.0
        %v366 = vmul.f32 %v352, 2.0
        %v367 = vmul.f32 %v328, 2.0
        %v368 = vmul.f32 %v356, 2.0
        %vm381 = vcmask 1046528
        %v382 = vrot.slane %v357, 1
        %v383 = vrot.slane %v358, 1
        %v384 = vsel %vm381, %v382, %v383
        %v385 = vrot.slane %v359, 1
        %v386 = vsel %vm381, %v383, %v385
        %v387 = vrot.slane %v360, 1
        %v388 = vrot.slane %v361, 1
        %v389 = vsel %vm381, %v387, %v388
        %v390 = vrot.slane %v362, 1
        %v391 = vsel %vm381, %v388, %v390
        %v392 = vrot.slane %v363, 1
        %v393 = vrot.slane %v364, 1
        %v394 = vsel %vm381, %v392, %v393
        %v395 = vrot.slane %v365, 1
        %v396 = vsel %vm381, %v393, %v395
        %v397 = vrot.slane %v366, 1
        %v398 = vrot.slane %v367, 1
        %v399 = vsel %vm381, %v397, %v398
        %v400 = vrot.slane %v368, 1
        %v401 = vsel %vm381, %v398, %v400
        %v410 = vadd.f32 %v349, %v384
        %v411 = vadd.f32 %v319, %v386
        %v412 = vadd.f32 %v350, %v389
        %v413 = vadd.f32 %v322, %v391
        %v414 = vadd.f32 %v351, %v394
        %v415 = vadd.f32 %v325, %v396
        %v416 = vadd.f32 %v352, %v399
        %v417 = vadd.f32 %v328, %v401
        %vm426 = vcmask 1045504
        %v427 = vrot.slane %v349, 2
        %v428 = vrot.slane %v319, 2
        %v429 = vsel %vm426, %v427, %v428
        %v430 = vrot.slane %v353, 2
        %v431 = vsel %vm426, %v428, %v430
        %v432 = vrot.slane %v350, 2
        %v433 = vrot.slane %v322, 2
        %v434 = vsel %vm426, %v432, %v433
        %v435 = vrot.slane %v354, 2
        %v436 = vsel %vm426, %v433, %v435
        %v437 = vrot.slane %v351, 2
        %v438 = vrot.slane %v325, 2
        %v439 = vsel %vm426, %v437, %v438
        %v440 = vrot.slane %v355, 2
        %v441 = vsel %vm426, %v438, %v440
        %v442 = vrot.slane %v352, 2
        %v443 = vrot.slane %v328, 2
        %v444 = vsel %vm426, %v442, %v443
        %v445 = vrot.slane %v356, 2
        %v446 = vsel %vm426, %v443, %v445
        %v455 = vadd.f32 %v410, %v429
        %v456 = vadd.f32 %v411, %v431
        %v457 = vadd.f32 %v412, %v434
        %v458 = vadd.f32 %v413, %v436
        %v459 = vadd.f32 %v414, %v439
        %v460 = vadd.f32 %v415, %v441
        %v461 = vadd.f32 %v416, %v444
        %v462 = vadd.f32 %v417, %v446
        %v463 = vmul.f32 %v455, 0.0625
        %v464 = vmul.f32 %v456, 0.0625
        %v465 = vmul.f32 %v457, 0.0625
        %v466 = vmul.f32 %v458, 0.0625
        %v467 = vmul.f32 %v459, 0.0625
        %v468 = vmul.f32 %v460, 0.0625
        %v469 = vmul.f32 %v461, 0.0625
        %v470 = vmul.f32 %v462, 0.0625
        %vm471 = vcmask 130048
        %472 = vst.msk [vmem:[%s135] sm:$0xff] %vm471, %v463
        %473 = vst.msk [vmem:[%s135 + $0x8] sm:$0xff] %vm471, %v464
        %474 = vst.msk [vmem:[%s135 + $0x10] sm:$0xff] %vm471, %v465
        %475 = vst.msk [vmem:[%s135 + $0x18] sm:$0xff] %vm471, %v466
        %476 = vst.msk [vmem:[%s135 + $0x20] sm:$0xff] %vm471, %v467
        %477 = vst.msk [vmem:[%s135 + $0x28] sm:$0xff] %vm471, %v468
        %478 = vst.msk [vmem:[%s135 + $0x30] sm:$0xff] %vm471, %v469
        %479 = vst.msk [vmem:[%s135 + $0x38] sm:$0xff] %vm471, %v470
        %s480 = sand.u32 %s52, 1
        %s481 = scalar_lea.sflag [#allocation4], %s480
        %s482 = sand.u32 %s52, 1
        %s483 = smul.addr %s482, 64
        %s484 = scalar_lea.vmem [#allocation5], %s483
        // Predicated region
        $region29: #{tpu_custom_call.1} parent=23 // pred_check
          %p485 = pneg %p62
        $region30: #{tpu_custom_call.1} parent=23 // pred_check_branch
          %487 = sbr.rel (%p485) target = $region32
        $region31: #{tpu_custom_call.1} parent=23 // pred_region
          %s488 = smul.u32 4, %s18
          %s490 = ssub.s32 1024, 1024
          %491 = vsyncadd %s481, %s490
          %s492 = smul.addr %s488, 2
          %s493 = smul.addr %s492, 128
          %s494 = scalar_lea.hbm %s1, %s493
          %s495 = sshll.u32 %s484, 4
          %s496 = int_to_ptr.vmem [resolvable:$true] %s495
          %501 = dma.vmem_to_hbm [thread:$0]  %s496, 1024, %s494, %s481, 128, 128, 8
        $region32: #{tpu_custom_call.1} parent=23 // pred_fallthru
          _
      $region24: #{tpu_custom_call.1} parent=5 // pred_fallthru
        _
      %p502 = scmp.le.s32.totalorder 2, %s13
      // Predicated region
      $region33: #{tpu_custom_call.1} parent=5 // pred_check
        %p503 = pneg %p502
      $region34: #{tpu_custom_call.1} parent=5 // pred_check_branch
        %505 = sbr.rel (%p503) target = $region36
      $region35: #{tpu_custom_call.1} parent=5 // pred_region
        %s506 = ssub.s32 %s13, 2
        // Predicated region
        $region37: #{tpu_custom_call.1} parent=35 // pred_check
          %p507 = pneg %p68
        $region38: #{tpu_custom_call.1} parent=35 // pred_check_branch
          %509 = sbr.rel (%p507) target = $region40
        $region39: #{tpu_custom_call.1} parent=35 // pred_region
          %s510 = sand.u32 %s53, 1
          %s511 = scalar_lea.sflag [#allocation4], %s510
          %s512 = sand.u32 %s53, 1
          %s513 = smul.addr %s512, 64
          %s514 = scalar_lea.vmem [#allocation5], %s513
          %515 = dma.done %s511, 1024
        $region40: #{tpu_custom_call.1} parent=35 // pred_fallthru
          _
      $region36: #{tpu_custom_call.1} parent=5 // pred_fallthru
        _
    $region6: #{tpu_custom_call.1} parent=1 // loop_footer
      %s17 = sadd.s32 1, %s13
    $region7: #{tpu_custom_call.1} parent=1 // loop_footer_branch
      %12 = sbr.rel target = $region3
    $region8: #{tpu_custom_call.1} parent=1 // loop_exit
      _
    %516 = vsyncpa [#allocation3], 1
    %s517 = scalar_lea.sflag [#allocation3], 1
    %518 = vsyncpa %s517, 1
    %519 = vsyncpa [#allocation4], 1
    %s520 = scalar_lea.sflag [#allocation4], 1
    %521 = vsyncpa %s520, 1

</llo_original>
